<compile_context>
chip_gen: v7x
topology: tpu7x:2x2x1
jax: 0.10.0
libtpu: 0.0.40
codegen_flags: <defaults>
</compile_context>

<pallas_src>
import math

import jax
import jax.numpy as jnp
from jax.experimental import pallas as pl
from jax.experimental.pallas import tpu as pltpu


# ----------------------------------------------------------------------------
# Kernels
# ----------------------------------------------------------------------------
def _mlp_resident_kernel(x_ref, w1_ref, b1_ref, w2_ref, b2_ref, o_ref):
    """Fast path: both weight matrices are fully VMEM-resident (constant index
    maps); one (tm, in_dim) row tile of x per grid step."""
    hid = jnp.dot(x_ref[...], w1_ref[...], preferred_element_type=jnp.float32)
    hid = jnp.maximum(hid + b1_ref[...], 0.0)                     # bias + ReLU
    out = jnp.dot(hid.astype(jnp.bfloat16), w2_ref[...],
                  preferred_element_type=jnp.float32)
    o_ref[...] = (out + b2_ref[...]).astype(o_ref.dtype)


def _mlp_stream_kernel(x_ref, w1_ref, b1_ref, w2_ref, b2_ref, o_ref, acc_ref):
    """Streaming path: hidden dim tiled in TH-wide chunks (last grid axis,
    "arbitrary"); f32 accumulator scratch persists across hidden steps."""
    h = pl.program_id(1)

    @pl.when(h == 0)
    def _():
        # Start the accumulation from the fc2 bias -> no epilogue add needed.
        acc_ref[...] = jnp.broadcast_to(b2_ref[...], acc_ref.shape)

    hid = jnp.dot(x_ref[...], w1_ref[...], preferred_element_type=jnp.float32)
    hid = jnp.maximum(hid + b1_ref[...], 0.0)
    acc_ref[...] += jnp.dot(hid.astype(jnp.bfloat16), w2_ref[...],
                            preferred_element_type=jnp.float32)

    @pl.when(h == pl.num_programs(1) - 1)
    def _():
        o_ref[...] = acc_ref[...].astype(o_ref.dtype)


# ----------------------------------------------------------------------------
# Wrapper
# ----------------------------------------------------------------------------
def _round_up(x, m):
    return (x + m - 1) // m * m


def _vmem_limit_bytes():
    """Scoped-VMEM budget: ~13/16 of physical VMEM, leaving compiler headroom
    (~52 MiB on v7x's 64 MiB, ~104 MiB on v5e/v6e's 128 MiB)."""
    try:
        cap = int(pltpu.get_tpu_info().vmem_capacity_bytes)
    except Exception:
        cap = 64 * 1024 * 1024          # conservative default (v7x per-TC VMEM)
    return cap * 13 // 16


def prepare_mlp_params(w_fc1, b_fc1, w_fc2, b_fc2):
    """One-time weight prep: transpose to (in, out) layout + cast to bf16.
    Do this at parameter init and reuse across forward calls so layout
    conversion never hits HBM on the per-call path."""
    w1t = jnp.asarray(w_fc1).T.astype(jnp.bfloat16)       # (in_dim, h_dim)
    w2t = jnp.asarray(w_fc2).T.astype(jnp.bfloat16)       # (h_dim, out_d)
    b1 = jnp.asarray(b_fc1).reshape(1, -1).astype(jnp.float32)
    b2 = jnp.asarray(b_fc2).reshape(1, -1).astype(jnp.float32)
    return w1t, b1, w2t, b2


def mlp_transformer_apply(x, params, *, tm=None, th=None, out_dtype=None,
                          force_stream=False):
    """y = fc2(relu(fc1(x))) with prepared params; x: (..., in_dim)."""
    w1t, b1, w2t, b2 = params
    orig_shape = x.shape
    in_dim = orig_shape[-1]
    h_dim = w1t.shape[1]
    out_d = w2t.shape[1]
    out_dtype = out_dtype if out_dtype is not None else x.dtype
    out_bytes = jnp.dtype(out_dtype).itemsize

    M = math.prod(orig_shape[:-1]) if len(orig_shape) > 1 else 1
    x2 = x.reshape(M, in_dim).astype(jnp.bfloat16)

    vmem_limit = _vmem_limit_bytes()
    slack = 2 * 1024 * 1024                 # vregs / compiler-internal scratch

    # ---- row tile: big enough to amortize weight traffic; keep >=2 row tiles
    # when M allows so the "parallel" axis feeds both v7x TensorCores. --------
    if tm is None:
        for cand in (512, 256, 128):
            if M >= 2 * cand:
                tm = cand
                break
        else:
            tm = min(256, _round_up(max(M, 1), 8))
    Mp = _round_up(M, tm)

    def resident_bytes(hp):
        return (2 * tm * in_dim * 2                # x tiles (double-buffered bf16)
                + 2 * in_dim * hp * 2              # W1^T (counted double-buffered)
                + 2 * hp * out_d * 2               # W2^T
                + 2 * hp * 4 + 2 * out_d * 4       # biases (f32)
                + 2 * tm * out_d * out_bytes       # output tiles
                + tm * hp * 6                      # f32 hid + bf16 recast
                + slack)

    def stream_bytes(ht):
        return (2 * tm * in_dim * 2
                + 2 * in_dim * ht * 2
                + 2 * ht * out_d * 2
                + 2 * ht * 4 + 2 * out_d * 4
                + 2 * tm * out_d * out_bytes
                + tm * out_d * 4                   # f32 accumulator scratch
                + tm * ht * 6
                + slack)

    h_pad128 = _round_up(h_dim, 128)
    if force_stream or th is not None:
        use_resident = False
    else:
        use_resident = resident_bytes(h_pad128) <= vmem_limit

    if use_resident:
        Hp = h_pad128
    else:
        if th is None:
            for cand in (1024, 512, 256, 128):
                if h_dim >= cand and stream_bytes(cand) <= vmem_limit:
                    th = cand
                    break
            else:
                th = 128
        Hp = _round_up(h_dim, th)

    # ---- zero-pad to tile multiples (zeros are exact no-ops through ReLU and
    # the matmuls); padded output rows are sliced off afterwards. -------------
    if Mp != M:
        x2 = jnp.pad(x2, ((0, Mp - M), (0, 0)))
    if Hp != h_dim:
        w1t = jnp.pad(w1t, ((0, 0), (0, Hp - h_dim)))
        b1 = jnp.pad(b1, ((0, 0), (0, Hp - h_dim)))
        w2t = jnp.pad(w2t, ((0, Hp - h_dim), (0, 0)))

    if use_resident:
        out = pl.pallas_call(
            _mlp_resident_kernel,
            out_shape=jax.ShapeDtypeStruct((Mp, out_d), out_dtype),
            grid_spec=pltpu.PrefetchScalarGridSpec(
                num_scalar_prefetch=0,
                grid=(Mp // tm,),
                in_specs=[
                    pl.BlockSpec((tm, in_dim), lambda i: (i, 0)),   # x rows
                    pl.BlockSpec((in_dim, Hp), lambda i: (0, 0)),   # W1^T (resident)
                    pl.BlockSpec((1, Hp),      lambda i: (0, 0)),   # fc1 bias
                    pl.BlockSpec((Hp, out_d),  lambda i: (0, 0)),   # W2^T (resident)
                    pl.BlockSpec((1, out_d),   lambda i: (0, 0)),   # fc2 bias
                ],
                out_specs=pl.BlockSpec((tm, out_d), lambda i: (i, 0)),
            ),
            compiler_params=pltpu.CompilerParams(
                dimension_semantics=("parallel",),
                vmem_limit_bytes=vmem_limit,
            ),
        )(x2, w1t, b1, w2t, b2)
    else:
        out = pl.pallas_call(
            _mlp_stream_kernel,
            out_shape=jax.ShapeDtypeStruct((Mp, out_d), out_dtype),
            grid_spec=pltpu.PrefetchScalarGridSpec(
                num_scalar_prefetch=0,
                grid=(Mp // tm, Hp // th),
                in_specs=[
                    pl.BlockSpec((tm, in_dim), lambda i, h: (i, 0)),  # x rows
                    pl.BlockSpec((in_dim, th), lambda i, h: (0, h)),  # W1^T tile
                    pl.BlockSpec((1, th),      lambda i, h: (0, h)),  # fc1 bias tile
                    pl.BlockSpec((th, out_d),  lambda i, h: (h, 0)),  # W2^T tile
                    pl.BlockSpec((1, out_d),   lambda i, h: (0, 0)),  # fc2 bias
                ],
                out_specs=pl.BlockSpec((tm, out_d), lambda i, h: (i, 0)),
                scratch_shapes=[pltpu.VMEM((tm, out_d), jnp.float32)],
            ),
            compiler_params=pltpu.CompilerParams(
                dimension_semantics=("parallel", "arbitrary"),
                vmem_limit_bytes=vmem_limit,
            ),
        )(x2, w1t, b1, w2t, b2)

    if Mp != M:
        out = out[:M]
    return out.reshape(orig_shape[:-1] + (out_d,))


def mlp_transformer(x, w_fc1, b_fc1, w_fc2, b_fc2, **kwargs):
    """Convenience wrapper from PyTorch-layout weights (out_features, in_features).
    Prefer prepare_mlp_params() once + mlp_transformer_apply() per call."""
    return mlp_transformer_apply(
        x, prepare_mlp_params(w_fc1, b_fc1, w_fc2, b_fc2), **kwargs)


# ----------------------------------------------------------------------------
# Reference + self-test
# ----------------------------------------------------------------------------
def _reference(x, w_fc1, b_fc1, w_fc2, b_fc2):
    """Pure-JAX f32 mirror of the PyTorch forward (dropout p=0)."""
    h = jnp.maximum(x @ w_fc1.T + b_fc1, 0.0)
    return h @ w_fc2.T + b_fc2


if __name__ == "__main__":
    # TODO(synk): dropout is p=0.0 (eval mode) -> identity; not implemented as a kernel op.
    B, N, C = 2, 128, 128
    H = 4 * C            # h_dim
    OUT = C              # out_d defaults to in_dim in the module

    key = jax.random.PRNGKey(0)
    k0, k1, k2, k3, k4 = jax.random.split(key, 5)

    x = jax.random.normal(k0, (B, N, C), dtype=jnp.float32)
    w_fc1 = jax.random.normal(k1, (H, C), dtype=jnp.float32) * 0.05
    b_fc1 = jax.random.normal(k2, (H,), dtype=jnp.float32) * 0.05
    w_fc2 = jax.random.normal(k3, (OUT, H), dtype=jnp.float32) * 0.05
    b_fc2 = jax.random.normal(k4, (OUT,), dtype=jnp.float32) * 0.05

    params = prepare_mlp_params(w_fc1, b_fc1, w_fc2, b_fc2)   # one-time prep
    ref = _reference(x, w_fc1, b_fc1, w_fc2, b_fc2)

    # 1) Default path: weights tiny -> fully VMEM-resident fast path.
    out_res = jax.block_until_ready(mlp_transformer_apply(x, params))
    assert out_res.shape == (B, N, OUT)
    err = float(jnp.max(jnp.abs(out_res - ref)))
    assert jnp.allclose(out_res, ref, atol=3e-2, rtol=3e-2), ("resident", err)

    # 2) Forced streaming path (2 row tiles x 2 hidden tiles) to exercise the
    #    accumulator / hidden-reduction grid axis.
    out_str = jax.block_until_ready(
        mlp_transformer_apply(x, params, tm=128, th=256, force_stream=True))
    err = float(jnp.max(jnp.abs(out_str - ref)))
    assert jnp.allclose(out_str, ref, atol=3e-2, rtol=3e-2), ("stream", err)

    # 3) Non-divisible row count -> exercises zero-padding + output slicing.
    x_odd = jax.random.normal(k0, (3, 50, C), dtype=jnp.float32)
    ref_odd = _reference(x_odd, w_fc1, b_fc1, w_fc2, b_fc2)
    out_odd = jax.block_until_ready(mlp_transformer_apply(x_odd, params))
    assert out_odd.shape == (3, 50, OUT)
    err = float(jnp.max(jnp.abs(out_odd - ref_odd)))
    assert jnp.allclose(out_odd, ref_odd, atol=3e-2, rtol=3e-2), ("padded", err)

    print("KERNEL_OK")
</pallas_src>

<mosaic_0001>
module attributes {stable_mosaic.version = 11 : i64} {
  func.func @_mlp_resident_kernel(%arg0: i32, %arg1: memref<128x128xbf16, #tpu.memory_space<vmem>>, %arg2: memref<128x512xbf16, #tpu.memory_space<vmem>>, %arg3: memref<1x512xf32, #tpu.memory_space<vmem>>, %arg4: memref<512x128xbf16, #tpu.memory_space<vmem>>, %arg5: memref<1x128xf32, #tpu.memory_space<vmem>>, %arg6: memref<128x128xf32, #tpu.memory_space<vmem>>) attributes {dimension_semantics = [#tpu.dimension_semantics<parallel>], iteration_bounds = array<i64: 2>, scalar_prefetch = 0 : i64, scratch_operands = 0 : i64, tpu.core_type = #tpu.core_type<tc>, window_params = [{transform_indices = @transform_0, window_bounds = array<i64: 128, 128>}, {pipeline_mode = #tpu.pipeline_mode<synchronous>, transform_indices = @transform_1, window_bounds = array<i64: 128, 512>}, {pipeline_mode = #tpu.pipeline_mode<synchronous>, transform_indices = @transform_2, window_bounds = array<i64: 1, 512>}, {pipeline_mode = #tpu.pipeline_mode<synchronous>, transform_indices = @transform_3, window_bounds = array<i64: 512, 128>}, {pipeline_mode = #tpu.pipeline_mode<synchronous>, transform_indices = @transform_4, window_bounds = array<i64: 1, 128>}, {transform_indices = @transform_5, window_bounds = array<i64: 128, 128>}]} {
    %c0 = arith.constant 0 : index
    %c0_0 = arith.constant 0 : index
    %0 = vector.load %arg1[%c0, %c0_0] : memref<128x128xbf16, #tpu.memory_space<vmem>>, vector<128x128xbf16>
    %c0_1 = arith.constant 0 : index
    %c0_2 = arith.constant 0 : index
    %1 = vector.load %arg2[%c0_1, %c0_2] : memref<128x512xbf16, #tpu.memory_space<vmem>>, vector<128x512xbf16>
    %cst = arith.constant dense<0.000000e+00> : vector<128x512xf32>
    %2 = tpu.matmul %0, %1, %cst {dimension_numbers = #tpu.dot_dimension_numbers<[1], [0], [0], [1], [0, 0, 1, 1], [], []>} : vector<128x128xbf16>, vector<128x512xbf16>, vector<128x512xf32> -> vector<128x512xf32>
    %c0_3 = arith.constant 0 : index
    %c0_4 = arith.constant 0 : index
    %3 = vector.load %arg3[%c0_3, %c0_4] : memref<1x512xf32, #tpu.memory_space<vmem>>, vector<1x512xf32>
    %4 = vector.broadcast %3 : vector<1x512xf32> to vector<128x512xf32>
    %5 = arith.addf %2, %4 : vector<128x512xf32>
    %cst_5 = arith.constant 0.000000e+00 : f32
    %6 = vector.broadcast %cst_5 : f32 to vector<128x512xf32>
    %7 = arith.maximumf %5, %6 : vector<128x512xf32>
    %8 = arith.truncf %7 : vector<128x512xf32> to vector<128x512xbf16>
    %c0_6 = arith.constant 0 : index
    %c0_7 = arith.constant 0 : index
    %9 = vector.load %arg4[%c0_6, %c0_7] : memref<512x128xbf16, #tpu.memory_space<vmem>>, vector<512x128xbf16>
    %cst_8 = arith.constant dense<0.000000e+00> : vector<128x128xf32>
    %10 = tpu.matmul %8, %9, %cst_8 {dimension_numbers = #tpu.dot_dimension_numbers<[1], [0], [0], [1], [0, 0, 1, 1], [], []>} : vector<128x512xbf16>, vector<512x128xbf16>, vector<128x128xf32> -> vector<128x128xf32>
    %c0_9 = arith.constant 0 : index
    %c0_10 = arith.constant 0 : index
    %11 = vector.load %arg5[%c0_9, %c0_10] : memref<1x128xf32, #tpu.memory_space<vmem>>, vector<1x128xf32>
    %12 = vector.broadcast %11 : vector<1x128xf32> to vector<128x128xf32>
    %13 = arith.addf %10, %12 : vector<128x128xf32>
    %c0_11 = arith.constant 0 : index
    %c0_12 = arith.constant 0 : index
    %14 = vector.load %arg6[%c0_11, %c0_12] : memref<128x128xf32, #tpu.memory_space<vmem>>, vector<128x128xf32>
    tpu.vector_store %arg6[%c0_11, %c0_12], %13 {strides = array<i32>} : memref<128x128xf32, #tpu.memory_space<vmem>>, vector<128x128xf32>,
    return
  }
  func.func @transform_0(%arg0: i32) -> (i32, i32) {
    %c0_i32 = arith.constant 0 : i32
    %c0_i32_0 = arith.constant 0 : i32
    return %arg0, %c0_i32 : i32, i32
  }
  func.func @transform_1(%arg0: i32) -> (i32, i32) {
    %c0_i32 = arith.constant 0 : i32
    %c0_i32_0 = arith.constant 0 : i32
    %c0_i32_1 = arith.constant 0 : i32
    return %c0_i32, %c0_i32_0 : i32, i32
  }
  func.func @transform_2(%arg0: i32) -> (i32, i32) {
    %c0_i32 = arith.constant 0 : i32
    %c0_i32_0 = arith.constant 0 : i32
    %c0_i32_1 = arith.constant 0 : i32
    return %c0_i32, %c0_i32_0 : i32, i32
  }
  func.func @transform_3(%arg0: i32) -> (i32, i32) {
    %c0_i32 = arith.constant 0 : i32
    %c0_i32_0 = arith.constant 0 : i32
    %c0_i32_1 = arith.constant 0 : i32
    return %c0_i32, %c0_i32_0 : i32, i32
  }
  func.func @transform_4(%arg0: i32) -> (i32, i32) {
    %c0_i32 = arith.constant 0 : i32
    %c0_i32_0 = arith.constant 0 : i32
    %c0_i32_1 = arith.constant 0 : i32
    return %c0_i32, %c0_i32_0 : i32, i32
  }
  func.func @transform_5(%arg0: i32) -> (i32, i32) {
    %c0_i32 = arith.constant 0 : i32
    %c0_i32_0 = arith.constant 0 : i32
    return %arg0, %c0_i32 : i32, i32
  }
}

</mosaic_0001>

<llo_original>
// kernel: tpu_custom_call.1
$region0: #{tpu_custom_call.1}
  #allocation0 [shape = 'u32[]', space=smem, size = 0x4, offset = 0x4, fixed_abs, tag = 'smem constant byte address 0x4 - core index']
  #allocation1 [shape = 'u32[144,128]{1,0:T(1,128)}', space=vmem, size = 0x12000, scoped, tag = 'internal scratch']
  %s0 = inlined_call_operand.hbm [shape: bf16[256,128], index: 0, kind: input, shape index: {}]
  %s1 = inlined_call_operand.hbm [shape: bf16[128,512], index: 1, kind: input, shape index: {}]
  %s2 = inlined_call_operand.vmem [shape: f32[1,512], index: 2, kind: input, shape index: {}]
  %s3 = inlined_call_operand.hbm [shape: bf16[512,128], index: 3, kind: input, shape index: {}]
  %s4 = inlined_call_operand.vmem [shape: f32[1,128], index: 4, kind: input, shape index: {}]
  %s5 = inlined_call_operand.hbm [shape: f32[256,128], index: 5, kind: output, shape index: {}]
  %s6 = sld [smem:[#allocation0]]
  $region65: #{tpu_custom_call.1} parent=0
    _
  %s8 = ssub.s32 1, %s6
  %s9 = scalar_select 0, %s8, %s6
  $region1: #{tpu_custom_call.1} parent=0
    #allocation2 [shape = 'u8[65536]{0}', space=vmem, size = 0x10000, scoped, tag = 'input window, operand 0']
    #allocation3 [shape = 's32[2]{0}', space=sflag, size = 0x8, scoped, tag = 'scoped memory for tpu_custom_call.1']
    #allocation4 [shape = 's32[2]{0}', space=sflag, size = 0x8, scoped, tag = 'scoped memory for tpu_custom_call.1']
    #allocation5 [shape = 'u8[131072]{0}', space=vmem, size = 0x20000, scoped, tag = 'input window, operand 1, single buffered']
    #allocation6 [shape = 's32[1]{0}', space=sflag, size = 0x4, scoped, tag = 'scoped memory for tpu_custom_call.1']
    #allocation7 [shape = 'u8[131072]{0}', space=vmem, size = 0x20000, scoped, tag = 'input window, operand 3, single buffered']
    #allocation8 [shape = 'u8[131072]{0}', space=vmem, size = 0x20000, scoped, tag = 'output window, operand 0']
    %10 = vsyncpa [#allocation3], 0
    %s11 = scalar_lea.sflag [#allocation3], 1
    %12 = vsyncpa %s11, 0
    %13 = vsyncpa [#allocation6], 0
    %14 = vsyncpa [#allocation4], 0
    %s15 = scalar_lea.sflag [#allocation4], 1
    %16 = vsyncpa %s15, 0
    loop: start=0, step=1, limit=4
    $region2: #{tpu_custom_call.1} parent=1 // loop_pre_header
      _
    $region3: #{tpu_custom_call.1} parent=1 // loop_header
      %s18 = sphi 0, %s22
      %p19 = scmp.ge.s32.totalorder %s18, 4
      %s28 = sphi 0, %s30
      %s31 = sphi 0, %s28
      %s32 = sphi 0, %s31
      %s48 = sphi 0, %s32
      %s52 = sphi 0, %s52
      %s54 = sphi 0, %s52
      %s55 = sphi 0, %s54
      %s69 = sphi 0, %s55
      %s73 = sphi 0, %s73
      %s75 = sphi 0, %s73
      %s76 = sphi 0, %s75
      %s90 = sphi 0, %s76
      %s94 = sphi 0, %s94
      %s96 = sphi 0, %s94
      %s97 = sphi 0, %s96
      %s111 = sphi 0, %s97
      %s115 = sphi 0, %s115
      %s117 = sphi 0, %s115
      %s118 = sphi 0, %s117
      %s132 = sphi 0, %s118
      %s138 = sphi 0, %s140
      %s141 = sphi 0, %s138
      %s142 = sphi 0, %s141
      %s158 = sphi 0, %s142
    $region4: #{tpu_custom_call.1} parent=1 // loop_header_branch
      %21 = sbr.rel (%p19) target = $region8
    $region5: #{tpu_custom_call.1} parent=1 // loop_body
      %s23 = ssub.s32 %s18, 1
      %s24 = ssub.s32 %s18, 2
      %s25 = sadd.s32 %s18, 1
      %s26 = ssub.s32 %s18, %s25
      %p27 = scmp.eq.s32.totalorder %s26, 0
      %s29 = sadd.s32 %s28, 1
      %s30 = scalar_select %p27, %s28, %s29
      %p33 = pneg %p27
      %p34 = scmp.eq.s32.totalorder %s18, 1
      %p35 = por %p33, %p34
      %p36 = scmp.ne.s32.totalorder %s28, %s31
      %p37 = scmp.eq.s32.totalorder %s18, 0
      %p38 = por %p36, %p37
      %p39 = scmp.ne.s32.totalorder %s28, %s31
      %p40 = scmp.eq.s32.totalorder %s23, 1
      %p41 = por %p39, %p40
      %p42 = scmp.ne.s32.totalorder %s31, %s32
      %p43 = scmp.eq.s32.totalorder %s23, 0
      %p44 = por %p42, %p43
      %p45 = scmp.ne.s32.totalorder %s31, %s32
      %p46 = scmp.eq.s32.totalorder %s24, 1
      %p47 = por %p45, %p46
      %p49 = scmp.ne.s32.totalorder %s32, %s48
      %p50 = scmp.eq.s32.totalorder %s24, 0
      %p51 = por %p49, %p50
      %s53 = sadd.s32 %s52, 1
      %p56 = scmp.eq.s32.totalorder %s18, 1
      %p57 = scmp.ne.s32.totalorder %s52, %s54
      %p58 = scmp.eq.s32.totalorder %s18, 0
      %p59 = por %p57, %p58
      %p60 = scmp.ne.s32.totalorder %s52, %s54
      %p61 = scmp.eq.s32.totalorder %s23, 1
      %p62 = por %p60, %p61
      %p63 = scmp.ne.s32.totalorder %s54, %s55
      %p64 = scmp.eq.s32.totalorder %s23, 0
      %p65 = por %p63, %p64
      %p66 = scmp.ne.s32.totalorder %s54, %s55
      %p67 = scmp.eq.s32.totalorder %s24, 1
      %p68 = por %p66, %p67
      %p70 = scmp.ne.s32.totalorder %s55, %s69
      %p71 = scmp.eq.s32.totalorder %s24, 0
      %p72 = por %p70, %p71
      %s74 = sadd.s32 %s73, 1
      %p77 = scmp.eq.s32.totalorder %s18, 1
      %p78 = scmp.ne.s32.totalorder %s73, %s75
      %p79 = scmp.eq.s32.totalorder %s18, 0
      %p80 = por %p78, %p79
      %p81 = scmp.ne.s32.totalorder %s73, %s75
      %p82 = scmp.eq.s32.totalorder %s23, 1
      %p83 = por %p81, %p82
      %p84 = scmp.ne.s32.totalorder %s75, %s76
      %p85 = scmp.eq.s32.totalorder %s23, 0
      %p86 = por %p84, %p85
      %p87 = scmp.ne.s32.totalorder %s75, %s76
      %p88 = scmp.eq.s32.totalorder %s24, 1
      %p89 = por %p87, %p88
      %p91 = scmp.ne.s32.totalorder %s76, %s90
      %p92 = scmp.eq.s32.totalorder %s24, 0
      %p93 = por %p91, %p92
      %s95 = sadd.s32 %s94, 1
      %p98 = scmp.eq.s32.totalorder %s18, 1
      %p99 = scmp.ne.s32.totalorder %s94, %s96
      %p100 = scmp.eq.s32.totalorder %s18, 0
      %p101 = por %p99, %p100
      %p102 = scmp.ne.s32.totalorder %s94, %s96
      %p103 = scmp.eq.s32.totalorder %s23, 1
      %p104 = por %p102, %p103
      %p105 = scmp.ne.s32.totalorder %s96, %s97
      %p106 = scmp.eq.s32.totalorder %s23, 0
      %p107 = por %p105, %p106
      %p108 = scmp.ne.s32.totalorder %s96, %s97
      %p109 = scmp.eq.s32.totalorder %s24, 1
      %p110 = por %p108, %p109
      %p112 = scmp.ne.s32.totalorder %s97, %s111
      %p113 = scmp.eq.s32.totalorder %s24, 0
      %p114 = por %p112, %p113
      %s116 = sadd.s32 %s115, 1
      %p119 = scmp.eq.s32.totalorder %s18, 1
      %p120 = scmp.ne.s32.totalorder %s115, %s117
      %p121 = scmp.eq.s32.totalorder %s18, 0
      %p122 = por %p120, %p121
      %p123 = scmp.ne.s32.totalorder %s115, %s117
      %p124 = scmp.eq.s32.totalorder %s23, 1
      %p125 = por %p123, %p124
      %p126 = scmp.ne.s32.totalorder %s117, %s118
      %p127 = scmp.eq.s32.totalorder %s23, 0
      %p128 = por %p126, %p127
      %p129 = scmp.ne.s32.totalorder %s117, %s118
      %p130 = scmp.eq.s32.totalorder %s24, 1
      %p131 = por %p129, %p130
      %p133 = scmp.ne.s32.totalorder %s118, %s132
      %p134 = scmp.eq.s32.totalorder %s24, 0
      %p135 = por %p133, %p134
      %s136 = ssub.s32 %s18, %s25
      %p137 = scmp.eq.s32.totalorder %s136, 0
      %s139 = sadd.s32 %s138, 1
      %s140 = scalar_select %p137, %s138, %s139
      %p143 = pneg %p137
      %p144 = scmp.eq.s32.totalorder %s18, 1
      %p145 = por %p143, %p144
      %p146 = scmp.ne.s32.totalorder %s138, %s141
      %p147 = scmp.eq.s32.totalorder %s18, 0
      %p148 = por %p146, %p147
      %p149 = scmp.ne.s32.totalorder %s138, %s141
      %p150 = scmp.eq.s32.totalorder %s23, 1
      %p151 = por %p149, %p150
      %p152 = scmp.ne.s32.totalorder %s141, %s142
      %p153 = scmp.eq.s32.totalorder %s23, 0
      %p154 = por %p152, %p153
      %p155 = scmp.ne.s32.totalorder %s141, %s142
      %p156 = scmp.eq.s32.totalorder %s24, 1
      %p157 = por %p155, %p156
      %p159 = scmp.ne.s32.totalorder %s142, %s158
      %p160 = scmp.eq.s32.totalorder %s24, 0
      %p161 = por %p159, %p160
      %p162 = scmp.le.s32.totalorder 1, %s18
      %p163 = scmp.lt.s32.totalorder %s18, 3
      %p164 = pnand %p162, %p163
      %p165 = pneg %p164
      // Predicated region
      $region9: #{tpu_custom_call.1} parent=5 // pred_check
        _
      $region10: #{tpu_custom_call.1} parent=5 // pred_check_branch
        %167 = sbr.rel (%p164) target = $region12
      $region11: #{tpu_custom_call.1} parent=5 // pred_region
        %s168 = ssub.s32 %s18, 1
        // Predicated region
        $region13: #{tpu_custom_call.1} parent=11 // pred_check
          %p169 = pneg %p65
        $region14: #{tpu_custom_call.1} parent=11 // pred_check_branch
          %171 = sbr.rel (%p169) target = $region16
        $region15: #{tpu_custom_call.1} parent=11 // pred_region
          %s173 = ssub.s32 4096, 4096
          %174 = vsyncadd [#allocation6], %s173
          %s175 = sshll.u32 [#allocation5], 4
          %s176 = int_to_ptr.vmem [resolvable:$true] %s175
          %181 = dma.hbm_to_vmem [thread:$0]  %s1, 4096, %s176, [#allocation6], 256, 256, 16
        $region16: #{tpu_custom_call.1} parent=11 // pred_fallthru
          _
        // Predicated region
        $region17: #{tpu_custom_call.1} parent=11 // pred_check
          %p182 = pneg %p86
        $region18: #{tpu_custom_call.1} parent=11 // pred_check_branch
          %184 = sbr.rel (%p182) target = $region20
        $region19: #{tpu_custom_call.1} parent=11 // pred_region
          _
        $region20: #{tpu_custom_call.1} parent=11 // pred_fallthru
          _
        // Predicated region
        $region21: #{tpu_custom_call.1} parent=11 // pred_check
          %p185 = pneg %p107
        $region22: #{tpu_custom_call.1} parent=11 // pred_check_branch
          %187 = sbr.rel (%p185) target = $region24
        $region23: #{tpu_custom_call.1} parent=11 // pred_region
          %s189 = ssub.s32 4096, 4096
          %190 = vsyncadd [#allocation6], %s189
          %s191 = sshll.u32 [#allocation7], 4
          %s192 = int_to_ptr.vmem [resolvable:$true] %s191
          %197 = dma.hbm_to_vmem [thread:$0]  %s3, 4096, %s192, [#allocation6], 64, 64, 4
        $region24: #{tpu_custom_call.1} parent=11 // pred_fallthru
          _
        // Predicated region
        $region25: #{tpu_custom_call.1} parent=11 // pred_check
          %p198 = pneg %p128
        $region26: #{tpu_custom_call.1} parent=11 // pred_check_branch
          %200 = sbr.rel (%p198) target = $region28
        $region27: #{tpu_custom_call.1} parent=11 // pred_region
          _
        $region28: #{tpu_custom_call.1} parent=11 // pred_fallthru
          _
      $region12: #{tpu_custom_call.1} parent=5 // pred_fallthru
        _
      %p201 = scmp.lt.s32.totalorder %s18, 2
      // Predicated region
      $region29: #{tpu_custom_call.1} parent=5 // pred_check
        %p202 = pneg %p201
      $region30: #{tpu_custom_call.1} parent=5 // pred_check_branch
        %204 = sbr.rel (%p202) target = $region32
      $region31: #{tpu_custom_call.1} parent=5 // pred_region
        // Predicated region
        $region33: #{tpu_custom_call.1} parent=31 // pred_check
          %p205 = pneg %p38
        $region34: #{tpu_custom_call.1} parent=31 // pred_check_branch
          %207 = sbr.rel (%p205) target = $region36
        $region35: #{tpu_custom_call.1} parent=31 // pred_region
          %s208 = sand.u32 %s28, 1
          %s209 = scalar_lea.sflag [#allocation3], %s208
          %s210 = sand.u32 %s28, 1
          %s211 = smul.addr %s210, 64
          %s212 = scalar_lea.vmem [#allocation2], %s211
          %s213 = smul.u32 16, %s18
          %s215 = ssub.s32 1024, 1024
          %216 = vsyncadd %s209, %s215
          %s217 = smul.addr %s213, 64
          %s218 = scalar_lea.hbm %s0, %s217
          %s219 = sshll.u32 %s212, 4
          %s220 = int_to_ptr.vmem [resolvable:$true] %s219
          %225 = dma.hbm_to_vmem [thread:$0]  %s218, 1024, %s220, %s209, 64, 64, 4
        $region36: #{tpu_custom_call.1} parent=31 // pred_fallthru
          _
      $region32: #{tpu_custom_call.1} parent=5 // pred_fallthru
        _
      %p226 = scmp.le.s32.totalorder 1, %s18
      %p227 = scmp.lt.s32.totalorder %s18, 3
      %p228 = pnand %p226, %p227
      %p229 = pneg %p228
      // Predicated region
      $region37: #{tpu_custom_call.1} parent=5 // pred_check
        _
      $region38: #{tpu_custom_call.1} parent=5 // pred_check_branch
        %231 = sbr.rel (%p228) target = $region40
      $region39: #{tpu_custom_call.1} parent=5 // pred_region
        %s232 = ssub.s32 %s18, 1
        %s233 = sand.u32 %s31, 1
        %s234 = scalar_lea.sflag [#allocation3], %s233
        %s235 = sand.u32 %s31, 1
        %s236 = smul.addr %s235, 64
        %s237 = scalar_lea.vmem [#allocation2], %s236
        // Predicated region
        $region41: #{tpu_custom_call.1} parent=39 // pred_check
          %p238 = pneg %p44
        $region42: #{tpu_custom_call.1} parent=39 // pred_check_branch
          %240 = sbr.rel (%p238) target = $region44
        $region43: #{tpu_custom_call.1} parent=39 // pred_region
          %241 = dma.done %s234, 1024
        $region44: #{tpu_custom_call.1} parent=39 // pred_fallthru
          _
        // Predicated region
        $region45: #{tpu_custom_call.1} parent=39 // pred_check
          %p242 = pneg %p65
        $region46: #{tpu_custom_call.1} parent=39 // pred_check_branch
          %244 = sbr.rel (%p242) target = $region48
        $region47: #{tpu_custom_call.1} parent=39 // pred_region
          %245 = dma.done [#allocation6], 4096
        $region48: #{tpu_custom_call.1} parent=39 // pred_fallthru
          _
        // Predicated region
        $region49: #{tpu_custom_call.1} parent=39 // pred_check
          %p246 = pneg %p107
        $region50: #{tpu_custom_call.1} parent=39 // pred_check_branch
          %248 = sbr.rel (%p246) target = $region52
        $region51: #{tpu_custom_call.1} parent=39 // pred_region
          %249 = dma.done [#allocation6], 4096
        $region52: #{tpu_custom_call.1} parent=39 // pred_fallthru
          _
        %s250 = sand.u32 %s31, 1
        %s251 = scalar_lea.sflag [#allocation3], %s250
        %s252 = sand.u32 %s31, 1
        %s253 = smul.addr %s252, 64
        %s254 = scalar_lea.vmem [#allocation2], %s253
        %p255 = pneg %p44
        %p256 = pneg %p41
        %p257 = pneg %p65
        %p258 = pneg %p62
        %p259 = pneg %p86
        %p260 = pneg %p83
        %p261 = pneg %p107
        %p262 = pneg %p104
        %p263 = pneg %p128
        %p264 = pneg %p125
        %p265 = pneg %p154
        %p266 = pneg %p151
        %s267 = sand.u32 %s141, 1
        %s268 = scalar_lea.sflag [#allocation4], %s267
        %s269 = sand.u32 %s141, 1
        %s270 = smul.addr %s269, 128
        %s271 = scalar_lea.vmem [#allocation8], %s270
        %s272 = smul.u32 16, %s23
        %s273 = smul.u32 16, %s23
        %v275 = vld [vmem:[%s237] sm:$0xf]
        %v276 = vld [vmem:[%s237 + $0x4] sm:$0xf]
        %v277 = vld [vmem:[%s237 + $0x8] sm:$0xf]
        %v278 = vld [vmem:[%s237 + $0xc] sm:$0xf]
        %v279 = vld [vmem:[%s237 + $0x10] sm:$0xf]
        %v280 = vld [vmem:[%s237 + $0x14] sm:$0xf]
        %v281 = vld [vmem:[%s237 + $0x18] sm:$0xf]
        %v282 = vld [vmem:[%s237 + $0x1c] sm:$0xf]
        %v283 = vld [vmem:[%s237 + $0x20] sm:$0xf]
        %v284 = vld [vmem:[%s237 + $0x24] sm:$0xf]
        %v285 = vld [vmem:[%s237 + $0x28] sm:$0xf]
        %v286 = vld [vmem:[%s237 + $0x2c] sm:$0xf]
        %v287 = vld [vmem:[%s237 + $0x30] sm:$0xf]
        %v288 = vld [vmem:[%s237 + $0x34] sm:$0xf]
        %v289 = vld [vmem:[%s237 + $0x38] sm:$0xf]
        %v290 = vld [vmem:[%s237 + $0x3c] sm:$0xf]
        %v291 = vld [vmem:[#allocation5] sm:$0xff]
        %v292 = vld [vmem:[#allocation5 + $0x8] sm:$0xff]
        %v293 = vld [vmem:[#allocation5 + $0x10] sm:$0xff]
        %v294 = vld [vmem:[#allocation5 + $0x18] sm:$0xff]
        %v295 = vld [vmem:[#allocation5 + $0x20] sm:$0xff]
        %v296 = vld [vmem:[#allocation5 + $0x28] sm:$0xff]
        %v297 = vld [vmem:[#allocation5 + $0x30] sm:$0xff]
        %v298 = vld [vmem:[#allocation5 + $0x38] sm:$0xff]
        %v299 = vld [vmem:[#allocation5 + $0x40] sm:$0xff]
        %v300 = vld [vmem:[#allocation5 + $0x48] sm:$0xff]
        %v301 = vld [vmem:[#allocation5 + $0x50] sm:$0xff]
        %v302 = vld [vmem:[#allocation5 + $0x58] sm:$0xff]
        %v303 = vld [vmem:[#allocation5 + $0x60] sm:$0xff]
        %v304 = vld [vmem:[#allocation5 + $0x68] sm:$0xff]
        %v305 = vld [vmem:[#allocation5 + $0x70] sm:$0xff]
        %v306 = vld [vmem:[#allocation5 + $0x78] sm:$0xff]
        %v307 = vld [vmem:[#allocation5 + $0x80] sm:$0xff]
        %v308 = vld [vmem:[#allocation5 + $0x88] sm:$0xff]
        %v309 = vld [vmem:[#allocation5 + $0x90] sm:$0xff]
        %v310 = vld [vmem:[#allocation5 + $0x98] sm:$0xff]
        %v311 = vld [vmem:[#allocation5 + $0xa0] sm:$0xff]
        %v312 = vld [vmem:[#allocation5 + $0xa8] sm:$0xff]
        %v313 = vld [vmem:[#allocation5 + $0xb0] sm:$0xff]
        %v314 = vld [vmem:[#allocation5 + $0xb8] sm:$0xff]
        %v315 = vld [vmem:[#allocation5 + $0xc0] sm:$0xff]
        %v316 = vld [vmem:[#allocation5 + $0xc8] sm:$0xff]
        %v317 = vld [vmem:[#allocation5 + $0xd0] sm:$0xff]
        %v318 = vld [vmem:[#allocation5 + $0xd8] sm:$0xff]
        %v319 = vld [vmem:[#allocation5 + $0xe0] sm:$0xff]
        %v320 = vld [vmem:[#allocation5 + $0xe8] sm:$0xff]
        %v321 = vld [vmem:[#allocation5 + $0xf0] sm:$0xff]
        %v322 = vld [vmem:[#allocation5 + $0xf8] sm:$0xff]
        %v323 = vld [vmem:[%s2] sm:$0xf]
        %v325 = vlaneseq
        %v326 = vshrl.u32 %v325, 7
        %v327 = vsub.s32 0, %v326
        %v328 = vrot.slane %v323, %v327
        %v329 = vlaneseq
        %v330 = vshrl.u32 %v329, 7
        %v331 = vsub.s32 1, %v330
        %v332 = vrot.slane %v323, %v331
        %v333 = vlaneseq
        %v334 = vshrl.u32 %v333, 7
        %v335 = vsub.s32 2, %v334
        %v336 = vrot.slane %v323, %v335
        %v337 = vlaneseq
        %v338 = vshrl.u32 %v337, 7
        %v339 = vsub.s32 3, %v338
        %v340 = vrot.slane %v323, %v339
        %v361 = vunpack.c.l.b16 %v275
        %v362 = vunpack.c.l.b16 %v276
        %v363 = vunpack.c.l.b16 %v277
        %v364 = vunpack.c.l.b16 %v278
        %v365 = vunpack.c.l.b16 %v279
        %v366 = vunpack.c.l.b16 %v280
        %v367 = vunpack.c.l.b16 %v281
        %v368 = vunpack.c.l.b16 %v282
        %v369 = vunpack.c.l.b16 %v283
        %v370 = vunpack.c.l.b16 %v284
        %v371 = vunpack.c.l.b16 %v285
        %v372 = vunpack.c.l.b16 %v286
        %v373 = vunpack.c.l.b16 %v287
        %v374 = vunpack.c.l.b16 %v288
        %v375 = vunpack.c.l.b16 %v289
        %v376 = vunpack.c.l.b16 %v290
        %v377 = vpack.c.b16 %v362, %v361
        %v378 = vpack.c.b16 %v364, %v363
        %v379 = vpack.c.b16 %v366, %v365
        %v380 = vpack.c.b16 %v368, %v367
        %v381 = vpack.c.b16 %v370, %v369
        %v382 = vpack.c.b16 %v372, %v371
        %v383 = vpack.c.b16 %v374, %v373
        %v384 = vpack.c.b16 %v376, %v375
        %v425 = vunpack.c.l.b16 %v291
        %v426 = vunpack.c.h.b16 %v291
        %v427 = vunpack.c.l.b16 %v292
        %v428 = vunpack.c.h.b16 %v292
        %v429 = vunpack.c.l.b16 %v293
        %v430 = vunpack.c.h.b16 %v293
        %v431 = vunpack.c.l.b16 %v294
        %v432 = vunpack.c.h.b16 %v294
        %v433 = vunpack.c.l.b16 %v295
        %v434 = vunpack.c.h.b16 %v295
        %v435 = vunpack.c.l.b16 %v296
        %v436 = vunpack.c.h.b16 %v296
        %v437 = vunpack.c.l.b16 %v297
        %v438 = vunpack.c.h.b16 %v297
        %v439 = vunpack.c.l.b16 %v298
        %v440 = vunpack.c.h.b16 %v298
        %v441 = vunpack.c.l.b16 %v299
        %v442 = vunpack.c.h.b16 %v299
        %v443 = vunpack.c.l.b16 %v300
        %v444 = vunpack.c.h.b16 %v300
        %v445 = vunpack.c.l.b16 %v301
        %v446 = vunpack.c.h.b16 %v301
        %v447 = vunpack.c.l.b16 %v302
        %v448 = vunpack.c.h.b16 %v302
        %v449 = vunpack.c.l.b16 %v303
        %v450 = vunpack.c.h.b16 %v303
        %v451 = vunpack.c.l.b16 %v304
        %v452 = vunpack.c.h.b16 %v304
        %v453 = vunpack.c.l.b16 %v305
        %v454 = vunpack.c.h.b16 %v305
        %v455 = vunpack.c.l.b16 %v306
        %v456 = vunpack.c.h.b16 %v306
        %v457 = vunpack.c.l.b16 %v307
        %v458 = vunpack.c.h.b16 %v307
        %v459 = vunpack.c.l.b16 %v308
        %v460 = vunpack.c.h.b16 %v308
        %v461 = vunpack.c.l.b16 %v309
        %v462 = vunpack.c.h.b16 %v309
        %v463 = vunpack.c.l.b16 %v310
        %v464 = vunpack.c.h.b16 %v310
        %v465 = vunpack.c.l.b16 %v311
        %v466 = vunpack.c.h.b16 %v311
        %v467 = vunpack.c.l.b16 %v312
        %v468 = vunpack.c.h.b16 %v312
        %v469 = vunpack.c.l.b16 %v313
        %v470 = vunpack.c.h.b16 %v313
        %v471 = vunpack.c.l.b16 %v314
        %v472 = vunpack.c.h.b16 %v314
        %v473 = vunpack.c.l.b16 %v315
        %v474 = vunpack.c.h.b16 %v315
        %v475 = vunpack.c.l.b16 %v316
        %v476 = vunpack.c.h.b16 %v316
        %v477 = vunpack.c.l.b16 %v317
        %v478 = vunpack.c.h.b16 %v317
        %v479 = vunpack.c.l.b16 %v318
        %v480 = vunpack.c.h.b16 %v318
        %v481 = vunpack.c.l.b16 %v319
        %v482 = vunpack.c.h.b16 %v319
        %v483 = vunpack.c.l.b16 %v320
        %v484 = vunpack.c.h.b16 %v320
        %v485 = vunpack.c.l.b16 %v321
        %v486 = vunpack.c.h.b16 %v321
        %v487 = vunpack.c.l.b16 %v322
        %v488 = vunpack.c.h.b16 %v322
        %v489 = vpack.c.b16 %v429, %v425
        %v490 = vpack.c.b16 %v430, %v426
        %v491 = vpack.c.b16 %v431, %v427
        %v492 = vpack.c.b16 %v432, %v428
        %v493 = vpack.c.b16 %v437, %v433
        %v494 = vpack.c.b16 %v438, %v434
        %v495 = vpack.c.b16 %v439, %v435
        %v496 = vpack.c.b16 %v440, %v436
        %v497 = vpack.c.b16 %v445, %v441
        %v498 = vpack.c.b16 %v446, %v442
        %v499 = vpack.c.b16 %v447, %v443
        %v500 = vpack.c.b16 %v448, %v444
        %v501 = vpack.c.b16 %v453, %v449
        %v502 = vpack.c.b16 %v454, %v450
        %v503 = vpack.c.b16 %v455, %v451
        %v504 = vpack.c.b16 %v456, %v452
        %v505 = vpack.c.b16 %v461, %v457
        %v506 = vpack.c.b16 %v462, %v458
        %v507 = vpack.c.b16 %v463, %v459
        %v508 = vpack.c.b16 %v464, %v460
        %v509 = vpack.c.b16 %v469, %v465
        %v510 = vpack.c.b16 %v470, %v466
        %v511 = vpack.c.b16 %v471, %v467
        %v512 = vpack.c.b16 %v472, %v468
        %v513 = vpack.c.b16 %v477, %v473
        %v514 = vpack.c.b16 %v478, %v474
        %v515 = vpack.c.b16 %v479, %v475
        %v516 = vpack.c.b16 %v480, %v476
        %v517 = vpack.c.b16 %v485, %v481
        %v518 = vpack.c.b16 %v486, %v482
        %v519 = vpack.c.b16 %v487, %v483
        %v520 = vpack.c.b16 %v488, %v484
        %553 = vmatprep.subr.bf16.mxu0 %v490
        %554 = vmatpush1.bf16.msra.mxu0 %v489
        %555 = vmatprep.subr.bf16.mxu0 %v494
        %556 = vmatpush1.bf16.msra.mxu0 %v493
        %557 = vmatprep.subr.bf16.mxu0 %v498
        %558 = vmatpush1.bf16.msra.mxu0 %v497
        %559 = vmatprep.subr.bf16.mxu0 %v502
        %560 = vmatpush1.bf16.msra.mxu0 %v501
        %561 = vmatprep.subr.bf16.mxu0 %v506
        %562 = vmatpush1.bf16.msra.mxu0 %v505
        %563 = vmatprep.subr.bf16.mxu0 %v510
        %564 = vmatpush1.bf16.msra.mxu0 %v509
        %565 = vmatprep.subr.bf16.mxu0 %v514
        %566 = vmatpush1.bf16.msra.mxu0 %v513
        %567 = vmatprep.subr.bf16.mxu0 %v518
        %568 = vmatpush1.bf16.msra.mxu0 %v517
        %569 = vmatprep.subr.bf16.mxu0 0
        %570 = vmatpush1.bf16.msra.mxu0 0
        %571 = vmatprep.subr.bf16.mxu0 0
        %572 = vmatpush1.bf16.msra.mxu0 0
        %573 = vmatprep.subr.bf16.mxu0 0
        %574 = vmatpush1.bf16.msra.mxu0 0
        %575 = vmatprep.subr.bf16.mxu0 0
        %576 = vmatpush1.bf16.msra.mxu0 0
        %577 = vmatprep.subr.bf16.mxu0 0
        %578 = vmatpush1.bf16.msra.mxu0 0
        %579 = vmatprep.subr.bf16.mxu0 0
        %580 = vmatpush1.bf16.msra.mxu0 0
        %581 = vmatprep.subr.bf16.mxu0 0
        %582 = vmatpush1.bf16.msra.mxu0 0
        %583 = vmatprep.subr.bf16.mxu0 0
        %584 = vmatpush1.bf16.msra.mxu0 0
        %585 = vmatprep.mubr.bf16.mxu0 0
        %586 = vmatmul.mubr.bf16.gmra.mrb[0].mxu0 %v377
        %v587 = vpop.f32.mrb[0].mxu0
        %v588 = vadd.f32 %v328, %v587
        %v589 = vpop.f32.mrb[0].mxu0
        %v590 = vadd.f32 %v332, %v589
        %v591 = vpop.f32.mrb[0].mxu0
        %v592 = vadd.f32 %v328, %v591
        %v593 = vpop.f32.mrb[0].mxu0
        %v594 = vadd.f32 %v332, %v593
        %595 = vmatprep.mubr.bf16.mxu0 0
        %596 = vmatmul.mubr.bf16.gmra.mrb[0].mxu0 %v378
        %v597 = vpop.f32.mrb[0].mxu0
        %v598 = vadd.f32 %v328, %v597
        %v599 = vpop.f32.mrb[0].mxu0
        %v600 = vadd.f32 %v332, %v599
        %v601 = vpop.f32.mrb[0].mxu0
        %v602 = vadd.f32 %v328, %v601
        %v603 = vpop.f32.mrb[0].mxu0
        %v604 = vadd.f32 %v332, %v603
        %605 = vmatprep.mubr.bf16.mxu0 0
        %606 = vmatmul.mubr.bf16.gmra.mrb[0].mxu0 %v379
        %v607 = vpop.f32.mrb[0].mxu0
        %v608 = vadd.f32 %v328, %v607
        %v609 = vpop.f32.mrb[0].mxu0
        %v610 = vadd.f32 %v332, %v609
        %v611 = vpop.f32.mrb[0].mxu0
        %v612 = vadd.f32 %v328, %v611
        %v613 = vpop.f32.mrb[0].mxu0
        %v614 = vadd.f32 %v332, %v613
        %615 = vmatprep.mubr.bf16.mxu0 0
        %616 = vmatmul.mubr.bf16.gmra.mrb[0].mxu0 %v380
        %v617 = vpop.f32.mrb[0].mxu0
        %v618 = vadd.f32 %v328, %v617
        %v619 = vpop.f32.mrb[0].mxu0
        %v620 = vadd.f32 %v332, %v619
        %v621 = vpop.f32.mrb[0].mxu0
        %v622 = vadd.f32 %v328, %v621
        %v623 = vpop.f32.mrb[0].mxu0
        %v624 = vadd.f32 %v332, %v623
        %625 = vmatprep.mubr.bf16.mxu0 0
        %626 = vmatmul.mubr.bf16.gmra.mrb[0].mxu0 %v381
        %v627 = vpop.f32.mrb[0].mxu0
        %v628 = vadd.f32 %v328, %v627
        %v629 = vpop.f32.mrb[0].mxu0
        %v630 = vadd.f32 %v332, %v629
        %v631 = vpop.f32.mrb[0].mxu0
        %v632 = vadd.f32 %v328, %v631
        %v633 = vpop.f32.mrb[0].mxu0
        %v634 = vadd.f32 %v332, %v633
        %635 = vmatprep.mubr.bf16.mxu0 0
        %636 = vmatmul.mubr.bf16.gmra.mrb[0].mxu0 %v382
        %v637 = vpop.f32.mrb[0].mxu0
        %v638 = vadd.f32 %v328, %v637
        %v639 = vpop.f32.mrb[0].mxu0
        %v640 = vadd.f32 %v332, %v639
        %v641 = vpop.f32.mrb[0].mxu0
        %v642 = vadd.f32 %v328, %v641
        %v643 = vpop.f32.mrb[0].mxu0
        %v644 = vadd.f32 %v332, %v643
        %645 = vmatprep.mubr.bf16.mxu0 0
        %646 = vmatmul.mubr.bf16.gmra.mrb[0].mxu0 %v383
        %v647 = vpop.f32.mrb[0].mxu0
        %v648 = vadd.f32 %v328, %v647
        %v649 = vpop.f32.mrb[0].mxu0
        %v650 = vadd.f32 %v332, %v649
        %v651 = vpop.f32.mrb[0].mxu0
        %v652 = vadd.f32 %v328, %v651
        %v653 = vpop.f32.mrb[0].mxu0
        %v654 = vadd.f32 %v332, %v653
        %655 = vmatprep.mubr.bf16.mxu0 0
        %656 = vmatmul.mubr.bf16.gmra.mrb[0].mxu0 %v384
        %v657 = vpop.f32.mrb[0].mxu0
        %v658 = vadd.f32 %v328, %v657
        %v659 = vpop.f32.mrb[0].mxu0
        %v660 = vadd.f32 %v332, %v659
        %v661 = vpop.f32.mrb[0].mxu0
        %v662 = vadd.f32 %v328, %v661
        %v663 = vpop.f32.mrb[0].mxu0
        %v664 = vadd.f32 %v332, %v663
        %665 = vdwg.mxu0
        %666 = vmatprep.subr.bf16.mxu0 %v492
        %667 = vmatpush1.bf16.msra.mxu0 %v491
        %668 = vmatprep.subr.bf16.mxu0 %v496
        %669 = vmatpush1.bf16.msra.mxu0 %v495
        %670 = vmatprep.subr.bf16.mxu0 %v500
        %671 = vmatpush1.bf16.msra.mxu0 %v499
        %672 = vmatprep.subr.bf16.mxu0 %v504
        %673 = vmatpush1.bf16.msra.mxu0 %v503
        %674 = vmatprep.subr.bf16.mxu0 %v508
        %675 = vmatpush1.bf16.msra.mxu0 %v507
        %676 = vmatprep.subr.bf16.mxu0 %v512
        %677 = vmatpush1.bf16.msra.mxu0 %v511
        %678 = vmatprep.subr.bf16.mxu0 %v516
        %679 = vmatpush1.bf16.msra.mxu0 %v515
        %680 = vmatprep.subr.bf16.mxu0 %v520
        %681 = vmatpush1.bf16.msra.mxu0 %v519
        %682 = vmatprep.subr.bf16.mxu0 0
        %683 = vmatpush1.bf16.msra.mxu0 0
        %684 = vmatprep.subr.bf16.mxu0 0
        %685 = vmatpush1.bf16.msra.mxu0 0
        %686 = vmatprep.subr.bf16.mxu0 0
        %687 = vmatpush1.bf16.msra.mxu0 0
        %688 = vmatprep.subr.bf16.mxu0 0
        %689 = vmatpush1.bf16.msra.mxu0 0
        %690 = vmatprep.subr.bf16.mxu0 0
        %691 = vmatpush1.bf16.msra.mxu0 0
        %692 = vmatprep.subr.bf16.mxu0 0
        %693 = vmatpush1.bf16.msra.mxu0 0
        %694 = vmatprep.subr.bf16.mxu0 0
        %695 = vmatpush1.bf16.msra.mxu0 0
        %696 = vmatprep.subr.bf16.mxu0 0
        %697 = vmatpush1.bf16.msra.mxu0 0
        %698 = vmatprep.mubr.bf16.mxu0 0
        %699 = vmatmul.mubr.bf16.gmra.mrb[0].mxu0 %v377
        %v700 = vpop.f32.mrb[0].mxu0
        %v701 = vadd.f32 %v336, %v700
        %v702 = vpop.f32.mrb[0].mxu0
        %v703 = vadd.f32 %v340, %v702
        %v704 = vpop.f32.mrb[0].mxu0
        %v705 = vadd.f32 %v336, %v704
        %v706 = vpop.f32.mrb[0].mxu0
        %v707 = vadd.f32 %v340, %v706
        %708 = vmatprep.mubr.bf16.mxu0 0
        %709 = vmatmul.mubr.bf16.gmra.mrb[0].mxu0 %v378
        %v710 = vpop.f32.mrb[0].mxu0
        %v711 = vadd.f32 %v336, %v710
        %v712 = vpop.f32.mrb[0].mxu0
        %v713 = vadd.f32 %v340, %v712
        %v714 = vpop.f32.mrb[0].mxu0
        %v715 = vadd.f32 %v336, %v714
        %v716 = vpop.f32.mrb[0].mxu0
        %v717 = vadd.f32 %v340, %v716
        %718 = vmatprep.mubr.bf16.mxu0 0
        %719 = vmatmul.mubr.bf16.gmra.mrb[0].mxu0 %v379
        %v720 = vpop.f32.mrb[0].mxu0
        %v721 = vadd.f32 %v336, %v720
        %v722 = vpop.f32.mrb[0].mxu0
        %v723 = vadd.f32 %v340, %v722
        %v724 = vpop.f32.mrb[0].mxu0
        %v725 = vadd.f32 %v336, %v724
        %v726 = vpop.f32.mrb[0].mxu0
        %v727 = vadd.f32 %v340, %v726
        %728 = vmatprep.mubr.bf16.mxu0 0
        %729 = vmatmul.mubr.bf16.gmra.mrb[0].mxu0 %v380
        %v730 = vpop.f32.mrb[0].mxu0
        %v731 = vadd.f32 %v336, %v730
        %v732 = vpop.f32.mrb[0].mxu0
        %v733 = vadd.f32 %v340, %v732
        %v734 = vpop.f32.mrb[0].mxu0
        %v735 = vadd.f32 %v336, %v734
        %v736 = vpop.f32.mrb[0].mxu0
        %v737 = vadd.f32 %v340, %v736
        %738 = vmatprep.mubr.bf16.mxu0 0
        %739 = vmatmul.mubr.bf16.gmra.mrb[0].mxu0 %v381
        %v740 = vpop.f32.mrb[0].mxu0
        %v741 = vadd.f32 %v336, %v740
        %v742 = vpop.f32.mrb[0].mxu0
        %v743 = vadd.f32 %v340, %v742
        %v744 = vpop.f32.mrb[0].mxu0
        %v745 = vadd.f32 %v336, %v744
        %v746 = vpop.f32.mrb[0].mxu0
        %v747 = vadd.f32 %v340, %v746
        %748 = vmatprep.mubr.bf16.mxu0 0
        %749 = vmatmul.mubr.bf16.gmra.mrb[0].mxu0 %v382
        %v750 = vpop.f32.mrb[0].mxu0
        %v751 = vadd.f32 %v336, %v750
        %v752 = vpop.f32.mrb[0].mxu0
        %v753 = vadd.f32 %v340, %v752
        %v754 = vpop.f32.mrb[0].mxu0
        %v755 = vadd.f32 %v336, %v754
        %v756 = vpop.f32.mrb[0].mxu0
        %v757 = vadd.f32 %v340, %v756
        %758 = vmatprep.mubr.bf16.mxu0 0
        %759 = vmatmul.mubr.bf16.gmra.mrb[0].mxu0 %v383
        %v760 = vpop.f32.mrb[0].mxu0
        %v761 = vadd.f32 %v336, %v760
        %v762 = vpop.f32.mrb[0].mxu0
        %v763 = vadd.f32 %v340, %v762
        %v764 = vpop.f32.mrb[0].mxu0
        %v765 = vadd.f32 %v336, %v764
        %v766 = vpop.f32.mrb[0].mxu0
        %v767 = vadd.f32 %v340, %v766
        %768 = vmatprep.mubr.bf16.mxu0 0
        %769 = vmatmul.mubr.bf16.gmra.mrb[0].mxu0 %v384
        %v770 = vpop.f32.mrb[0].mxu0
        %v771 = vadd.f32 %v336, %v770
        %v772 = vpop.f32.mrb[0].mxu0
        %v773 = vadd.f32 %v340, %v772
        %v774 = vpop.f32.mrb[0].mxu0
        %v775 = vadd.f32 %v336, %v774
        %v776 = vpop.f32.mrb[0].mxu0
        %v777 = vadd.f32 %v340, %v776
        %778 = vdwg.mxu0
        %v779 = vmax.f32 %v588, 0.0
        %v780 = vmax.f32 %v590, 0.0
        %v781 = vmax.f32 %v701, 0.0
        %v782 = vmax.f32 %v703, 0.0
        %v783 = vmax.f32 %v592, 0.0
        %v784 = vmax.f32 %v594, 0.0
        %v785 = vmax.f32 %v705, 0.0
        %v786 = vmax.f32 %v707, 0.0
        %v787 = vmax.f32 %v598, 0.0
        %v788 = vmax.f32 %v600, 0.0
        %v789 = vmax.f32 %v711, 0.0
        %v790 = vmax.f32 %v713, 0.0
        %v791 = vmax.f32 %v602, 0.0
        %v792 = vmax.f32 %v604, 0.0
        %v793 = vmax.f32 %v715, 0.0
        %v794 = vmax.f32 %v717, 0.0
        %v795 = vmax.f32 %v608, 0.0
        %v796 = vmax.f32 %v610, 0.0
        %v797 = vmax.f32 %v721, 0.0
        %v798 = vmax.f32 %v723, 0.0
        %v799 = vmax.f32 %v612, 0.0
        %v800 = vmax.f32 %v614, 0.0
        %v801 = vmax.f32 %v725, 0.0
        %v802 = vmax.f32 %v727, 0.0
        %v803 = vmax.f32 %v618, 0.0
        %v804 = vmax.f32 %v620, 0.0
        %v805 = vmax.f32 %v731, 0.0
        %v806 = vmax.f32 %v733, 0.0
        %v807 = vmax.f32 %v622, 0.0
        %v808 = vmax.f32 %v624, 0.0
        %v809 = vmax.f32 %v735, 0.0
        %v810 = vmax.f32 %v737, 0.0
        %v811 = vmax.f32 %v628, 0.0
        %v812 = vmax.f32 %v630, 0.0
        %v813 = vmax.f32 %v741, 0.0
        %v814 = vmax.f32 %v743, 0.0
        %v815 = vmax.f32 %v632, 0.0
        %v816 = vmax.f32 %v634, 0.0
        %v817 = vmax.f32 %v745, 0.0
        %v818 = vmax.f32 %v747, 0.0
        %v819 = vmax.f32 %v638, 0.0
        %v820 = vmax.f32 %v640, 0.0
        %v821 = vmax.f32 %v751, 0.0
        %v822 = vmax.f32 %v753, 0.0
        %v823 = vmax.f32 %v642, 0.0
        %v824 = vmax.f32 %v644, 0.0
        %v825 = vmax.f32 %v755, 0.0
        %v826 = vmax.f32 %v757, 0.0
        %v827 = vmax.f32 %v648, 0.0
        %v828 = vmax.f32 %v650, 0.0
        %v829 = vmax.f32 %v761, 0.0
        %v830 = vmax.f32 %v763, 0.0
        %v831 = vmax.f32 %v652, 0.0
        %v832 = vmax.f32 %v654, 0.0
        %v833 = vmax.f32 %v765, 0.0
        %v834 = vmax.f32 %v767, 0.0
        %v835 = vmax.f32 %v658, 0.0
        %v836 = vmax.f32 %v660, 0.0
        %v837 = vmax.f32 %v771, 0.0
        %v838 = vmax.f32 %v773, 0.0
        %v839 = vmax.f32 %v662, 0.0
        %v840 = vmax.f32 %v664, 0.0
        %v841 = vmax.f32 %v775, 0.0
        %v842 = vmax.f32 %v777, 0.0
        %v843 = vpack.c.bf16 %v783, %v779
        %v844 = vpack.c.bf16 %v784, %v780
        %v845 = vpack.c.bf16 %v785, %v781
        %v846 = vpack.c.bf16 %v786, %v782
        %v847 = vpack.c.bf16 %v791, %v787
        %v848 = vpack.c.bf16 %v792, %v788
        %v849 = vpack.c.bf16 %v793, %v789
        %v850 = vpack.c.bf16 %v794, %v790
        %v851 = vpack.c.bf16 %v799, %v795
        %v852 = vpack.c.bf16 %v800, %v796
        %v853 = vpack.c.bf16 %v801, %v797
        %v854 = vpack.c.bf16 %v802, %v798
        %v855 = vpack.c.bf16 %v807, %v803
        %v856 = vpack.c.bf16 %v808, %v804
        %v857 = vpack.c.bf16 %v809, %v805
        %v858 = vpack.c.bf16 %v810, %v806
        %v859 = vpack.c.bf16 %v815, %v811
        %v860 = vpack.c.bf16 %v816, %v812
        %v861 = vpack.c.bf16 %v817, %v813
        %v862 = vpack.c.bf16 %v818, %v814
        %v863 = vpack.c.bf16 %v823, %v819
        %v864 = vpack.c.bf16 %v824, %v820
        %v865 = vpack.c.bf16 %v825, %v821
        %v866 = vpack.c.bf16 %v826, %v822
        %v867 = vpack.c.bf16 %v831, %v827
        %v868 = vpack.c.bf16 %v832, %v828
        %v869 = vpack.c.bf16 %v833, %v829
        %v870 = vpack.c.bf16 %v834, %v830
        %v871 = vpack.c.bf16 %v839, %v835
        %v872 = vpack.c.bf16 %v840, %v836
        %v873 = vpack.c.bf16 %v841, %v837
        %v874 = vpack.c.bf16 %v842, %v838
        %v875 = vld [vmem:[#allocation7] sm:$0xf]
        %v876 = vld [vmem:[#allocation7 + $0x4] sm:$0xf]
        %v877 = vld [vmem:[#allocation7 + $0x8] sm:$0xf]
        %v878 = vld [vmem:[#allocation7 + $0xc] sm:$0xf]
        %v879 = vld [vmem:[#allocation7 + $0x10] sm:$0xf]
        %v880 = vld [vmem:[#allocation7 + $0x14] sm:$0xf]
        %v881 = vld [vmem:[#allocation7 + $0x18] sm:$0xf]
        %v882 = vld [vmem:[#allocation7 + $0x1c] sm:$0xf]
        %v883 = vld [vmem:[#allocation7 + $0x20] sm:$0xf]
        %v884 = vld [vmem:[#allocation7 + $0x24] sm:$0xf]
        %v885 = vld [vmem:[#allocation7 + $0x28] sm:$0xf]
        %v886 = vld [vmem:[#allocation7 + $0x2c] sm:$0xf]
        %v887 = vld [vmem:[#allocation7 + $0x30] sm:$0xf]
        %v888 = vld [vmem:[#allocation7 + $0x34] sm:$0xf]
        %v889 = vld [vmem:[#allocation7 + $0x38] sm:$0xf]
        %v890 = vld [vmem:[#allocation7 + $0x3c] sm:$0xf]
        %v891 = vld [vmem:[#allocation7 + $0x40] sm:$0xf]
        %v892 = vld [vmem:[#allocation7 + $0x44] sm:$0xf]
        %v893 = vld [vmem:[#allocation7 + $0x48] sm:$0xf]
        %v894 = vld [vmem:[#allocation7 + $0x4c] sm:$0xf]
        %v895 = vld [vmem:[#allocation7 + $0x50] sm:$0xf]
        %v896 = vld [vmem:[#allocation7 + $0x54] sm:$0xf]
        %v897 = vld [vmem:[#allocation7 + $0x58] sm:$0xf]
        %v898 = vld [vmem:[#allocation7 + $0x5c] sm:$0xf]
        %v899 = vld [vmem:[#allocation7 + $0x60] sm:$0xf]
        %v900 = vld [vmem:[#allocation7 + $0x64] sm:$0xf]
        %v901 = vld [vmem:[#allocation7 + $0x68] sm:$0xf]
        %v902 = vld [vmem:[#allocation7 + $0x6c] sm:$0xf]
        %v903 = vld [vmem:[#allocation7 + $0x70] sm:$0xf]
        %v904 = vld [vmem:[#allocation7 + $0x74] sm:$0xf]
        %v905 = vld [vmem:[#allocation7 + $0x78] sm:$0xf]
        %v906 = vld [vmem:[#allocation7 + $0x7c] sm:$0xf]
        %v907 = vld [vmem:[#allocation7 + $0x80] sm:$0xf]
        %v908 = vld [vmem:[#allocation7 + $0x84] sm:$0xf]
        %v909 = vld [vmem:[#allocation7 + $0x88] sm:$0xf]
        %v910 = vld [vmem:[#allocation7 + $0x8c] sm:$0xf]
        %v911 = vld [vmem:[#allocation7 + $0x90] sm:$0xf]
        %v912 = vld [vmem:[#allocation7 + $0x94] sm:$0xf]
        %v913 = vld [vmem:[#allocation7 + $0x98] sm:$0xf]
        %v914 = vld [vmem:[#allocation7 + $0x9c] sm:$0xf]
        %v915 = vld [vmem:[#allocation7 + $0xa0] sm:$0xf]
        %v916 = vld [vmem:[#allocation7 + $0xa4] sm:$0xf]
        %v917 = vld [vmem:[#allocation7 + $0xa8] sm:$0xf]
        %v918 = vld [vmem:[#allocation7 + $0xac] sm:$0xf]
        %v919 = vld [vmem:[#allocation7 + $0xb0] sm:$0xf]
        %v920 = vld [vmem:[#allocation7 + $0xb4] sm:$0xf]
        %v921 = vld [vmem:[#allocation7 + $0xb8] sm:$0xf]
        %v922 = vld [vmem:[#allocation7 + $0xbc] sm:$0xf]
        %v923 = vld [vmem:[#allocation7 + $0xc0] sm:$0xf]
        %v924 = vld [vmem:[#allocation7 + $0xc4] sm:$0xf]
        %v925 = vld [vmem:[#allocation7 + $0xc8] sm:$0xf]
        %v926 = vld [vmem:[#allocation7 + $0xcc] sm:$0xf]
        %v927 = vld [vmem:[#allocation7 + $0xd0] sm:$0xf]
        %v928 = vld [vmem:[#allocation7 + $0xd4] sm:$0xf]
        %v929 = vld [vmem:[#allocation7 + $0xd8] sm:$0xf]
        %v930 = vld [vmem:[#allocation7 + $0xdc] sm:$0xf]
        %v931 = vld [vmem:[#allocation7 + $0xe0] sm:$0xf]
        %v932 = vld [vmem:[#allocation7 + $0xe4] sm:$0xf]
        %v933 = vld [vmem:[#allocation7 + $0xe8] sm:$0xf]
        %v934 = vld [vmem:[#allocation7 + $0xec] sm:$0xf]
        %v935 = vld [vmem:[#allocation7 + $0xf0] sm:$0xf]
        %v936 = vld [vmem:[#allocation7 + $0xf4] sm:$0xf]
        %v937 = vld [vmem:[#allocation7 + $0xf8] sm:$0xf]
        %v938 = vld [vmem:[#allocation7 + $0xfc] sm:$0xf]
        %v939 = vld [vmem:[%s4] sm:$0x1]
        %v941 = vlaneseq
        %v942 = vshrl.u32 %v941, 7
        %v943 = vsub.s32 0, %v942
        %v944 = vrot.slane %v939, %v943
        %v1010 = vunpack.c.l.b16 %v875
        %v1011 = vunpack.c.l.b16 %v876
        %v1012 = vunpack.c.l.b16 %v877
        %v1013 = vunpack.c.l.b16 %v878
        %v1014 = vunpack.c.l.b16 %v879
        %v1015 = vunpack.c.l.b16 %v880
        %v1016 = vunpack.c.l.b16 %v881
        %v1017 = vunpack.c.l.b16 %v882
        %v1018 = vunpack.c.l.b16 %v883
        %v1019 = vunpack.c.l.b16 %v884
        %v1020 = vunpack.c.l.b16 %v885
        %v1021 = vunpack.c.l.b16 %v886
        %v1022 = vunpack.c.l.b16 %v887
        %v1023 = vunpack.c.l.b16 %v888
        %v1024 = vunpack.c.l.b16 %v889
        %v1025 = vunpack.c.l.b16 %v890
        %v1026 = vunpack.c.l.b16 %v891
        %v1027 = vunpack.c.l.b16 %v892
        %v1028 = vunpack.c.l.b16 %v893
        %v1029 = vunpack.c.l.b16 %v894
        %v1030 = vunpack.c.l.b16 %v895
        %v1031 = vunpack.c.l.b16 %v896
        %v1032 = vunpack.c.l.b16 %v897
        %v1033 = vunpack.c.l.b16 %v898
        %v1034 = vunpack.c.l.b16 %v899
        %v1035 = vunpack.c.l.b16 %v900
        %v1036 = vunpack.c.l.b16 %v901
        %v1037 = vunpack.c.l.b16 %v902
        %v1038 = vunpack.c.l.b16 %v903
        %v1039 = vunpack.c.l.b16 %v904
        %v1040 = vunpack.c.l.b16 %v905
        %v1041 = vunpack.c.l.b16 %v906
        %v1042 = vunpack.c.l.b16 %v907
        %v1043 = vunpack.c.l.b16 %v908
        %v1044 = vunpack.c.l.b16 %v909
        %v1045 = vunpack.c.l.b16 %v910
        %v1046 = vunpack.c.l.b16 %v911
        %v1047 = vunpack.c.l.b16 %v912
        %v1048 = vunpack.c.l.b16 %v913
        %v1049 = vunpack.c.l.b16 %v914
        %v1050 = vunpack.c.l.b16 %v915
        %v1051 = vunpack.c.l.b16 %v916
        %v1052 = vunpack.c.l.b16 %v917
        %v1053 = vunpack.c.l.b16 %v918
        %v1054 = vunpack.c.l.b16 %v919
        %v1055 = vunpack.c.l.b16 %v920
        %v1056 = vunpack.c.l.b16 %v921
        %v1057 = vunpack.c.l.b16 %v922
        %v1058 = vunpack.c.l.b16 %v923
        %v1059 = vunpack.c.l.b16 %v924
        %v1060 = vunpack.c.l.b16 %v925
        %v1061 = vunpack.c.l.b16 %v926
        %v1062 = vunpack.c.l.b16 %v927
        %v1063 = vunpack.c.l.b16 %v928
        %v1064 = vunpack.c.l.b16 %v929
        %v1065 = vunpack.c.l.b16 %v930
        %v1066 = vunpack.c.l.b16 %v931
        %v1067 = vunpack.c.l.b16 %v932
        %v1068 = vunpack.c.l.b16 %v933
        %v1069 = vunpack.c.l.b16 %v934
        %v1070 = vunpack.c.l.b16 %v935
        %v1071 = vunpack.c.l.b16 %v936
        %v1072 = vunpack.c.l.b16 %v937
        %v1073 = vunpack.c.l.b16 %v938
        %v1074 = vpack.c.b16 %v1011, %v1010
        %v1075 = vpack.c.b16 %v1013, %v1012
        %v1076 = vpack.c.b16 %v1015, %v1014
        %v1077 = vpack.c.b16 %v1017, %v1016
        %v1078 = vpack.c.b16 %v1019, %v1018
        %v1079 = vpack.c.b16 %v1021, %v1020
        %v1080 = vpack.c.b16 %v1023, %v1022
        %v1081 = vpack.c.b16 %v1025, %v1024
        %v1082 = vpack.c.b16 %v1027, %v1026
        %v1083 = vpack.c.b16 %v1029, %v1028
        %v1084 = vpack.c.b16 %v1031, %v1030
        %v1085 = vpack.c.b16 %v1033, %v1032
        %v1086 = vpack.c.b16 %v1035, %v1034
        %v1087 = vpack.c.b16 %v1037, %v1036
        %v1088 = vpack.c.b16 %v1039, %v1038
        %v1089 = vpack.c.b16 %v1041, %v1040
        %v1090 = vpack.c.b16 %v1043, %v1042
        %v1091 = vpack.c.b16 %v1045, %v1044
        %v1092 = vpack.c.b16 %v1047, %v1046
        %v1093 = vpack.c.b16 %v1049, %v1048
        %v1094 = vpack.c.b16 %v1051, %v1050
        %v1095 = vpack.c.b16 %v1053, %v1052
        %v1096 = vpack.c.b16 %v1055, %v1054
        %v1097 = vpack.c.b16 %v1057, %v1056
        %v1098 = vpack.c.b16 %v1059, %v1058
        %v1099 = vpack.c.b16 %v1061, %v1060
        %v1100 = vpack.c.b16 %v1063, %v1062
        %v1101 = vpack.c.b16 %v1065, %v1064
        %v1102 = vpack.c.b16 %v1067, %v1066
        %v1103 = vpack.c.b16 %v1069, %v1068
        %v1104 = vpack.c.b16 %v1071, %v1070
        %v1105 = vpack.c.b16 %v1073, %v1072
        %1138 = vmatprep.subr.bf16.mxu0 0
        %1139 = vmatpush1.bf16.msra.mxu0 %v1074
        %1140 = vmatprep.subr.bf16.mxu0 0
        %1141 = vmatpush1.bf16.msra.mxu0 %v1075
        %1142 = vmatprep.subr.bf16.mxu0 0
        %1143 = vmatpush1.bf16.msra.mxu0 %v1076
        %1144 = vmatprep.subr.bf16.mxu0 0
        %1145 = vmatpush1.bf16.msra.mxu0 %v1077
        %1146 = vmatprep.subr.bf16.mxu0 0
        %1147 = vmatpush1.bf16.msra.mxu0 %v1078
        %1148 = vmatprep.subr.bf16.mxu0 0
        %1149 = vmatpush1.bf16.msra.mxu0 %v1079
        %1150 = vmatprep.subr.bf16.mxu0 0
        %1151 = vmatpush1.bf16.msra.mxu0 %v1080
        %1152 = vmatprep.subr.bf16.mxu0 0
        %1153 = vmatpush1.bf16.msra.mxu0 %v1081
        %1154 = vmatprep.subr.bf16.mxu0 0
        %1155 = vmatpush1.bf16.msra.mxu0 %v1082
        %1156 = vmatprep.subr.bf16.mxu0 0
        %1157 = vmatpush1.bf16.msra.mxu0 %v1083
        %1158 = vmatprep.subr.bf16.mxu0 0
        %1159 = vmatpush1.bf16.msra.mxu0 %v1084
        %1160 = vmatprep.subr.bf16.mxu0 0
        %1161 = vmatpush1.bf16.msra.mxu0 %v1085
        %1162 = vmatprep.subr.bf16.mxu0 0
        %1163 = vmatpush1.bf16.msra.mxu0 %v1086
        %1164 = vmatprep.subr.bf16.mxu0 0
        %1165 = vmatpush1.bf16.msra.mxu0 %v1087
        %1166 = vmatprep.subr.bf16.mxu0 0
        %1167 = vmatpush1.bf16.msra.mxu0 %v1088
        %1168 = vmatprep.subr.bf16.mxu0 0
        %1169 = vmatpush1.bf16.msra.mxu0 %v1089
        %1170 = vmatprep.mubr.bf16.mxu0 %v844
        %1171 = vmatmul.mubr.bf16.gmra.mrb[0].mxu0 %v843
        %v1172 = vpop.f32.mrb[0].mxu0
        %v1173 = vadd.f32 %v944, %v1172
        %v1174 = vpop.f32.mrb[0].mxu0
        %v1175 = vpop.f32.mrb[0].mxu0
        %v1176 = vadd.f32 %v944, %v1175
        %v1177 = vpop.f32.mrb[0].mxu0
        %1178 = vmatprep.mubr.bf16.mxu0 %v848
        %1179 = vmatmul.mubr.bf16.gmra.mrb[0].mxu0 %v847
        %v1180 = vpop.f32.mrb[0].mxu0
        %v1181 = vadd.f32 %v944, %v1180
        %v1182 = vpop.f32.mrb[0].mxu0
        %v1183 = vpop.f32.mrb[0].mxu0
        %v1184 = vadd.f32 %v944, %v1183
        %v1185 = vpop.f32.mrb[0].mxu0
        %1186 = vmatprep.mubr.bf16.mxu0 %v852
        %1187 = vmatmul.mubr.bf16.gmra.mrb[0].mxu0 %v851
        %v1188 = vpop.f32.mrb[0].mxu0
        %v1189 = vadd.f32 %v944, %v1188
        %v1190 = vpop.f32.mrb[0].mxu0
        %v1191 = vpop.f32.mrb[0].mxu0
        %v1192 = vadd.f32 %v944, %v1191
        %v1193 = vpop.f32.mrb[0].mxu0
        %1194 = vmatprep.mubr.bf16.mxu0 %v856
        %1195 = vmatmul.mubr.bf16.gmra.mrb[0].mxu0 %v855
        %v1196 = vpop.f32.mrb[0].mxu0
        %v1197 = vadd.f32 %v944, %v1196
        %v1198 = vpop.f32.mrb[0].mxu0
        %v1199 = vpop.f32.mrb[0].mxu0
        %v1200 = vadd.f32 %v944, %v1199
        %v1201 = vpop.f32.mrb[0].mxu0
        %1202 = vmatprep.mubr.bf16.mxu0 %v860
        %1203 = vmatmul.mubr.bf16.gmra.mrb[0].mxu0 %v859
        %v1204 = vpop.f32.mrb[0].mxu0
        %v1205 = vadd.f32 %v944, %v1204
        %v1206 = vpop.f32.mrb[0].mxu0
        %v1207 = vpop.f32.mrb[0].mxu0
        %v1208 = vadd.f32 %v944, %v1207
        %v1209 = vpop.f32.mrb[0].mxu0
        %1210 = vmatprep.mubr.bf16.mxu0 %v864
        %1211 = vmatmul.mubr.bf16.gmra.mrb[0].mxu0 %v863
        %v1212 = vpop.f32.mrb[0].mxu0
        %v1213 = vadd.f32 %v944, %v1212
        %v1214 = vpop.f32.mrb[0].mxu0
        %v1215 = vpop.f32.mrb[0].mxu0
        %v1216 = vadd.f32 %v944, %v1215
        %v1217 = vpop.f32.mrb[0].mxu0
        %1218 = vmatprep.mubr.bf16.mxu0 %v868
        %1219 = vmatmul.mubr.bf16.gmra.mrb[0].mxu0 %v867
        %v1220 = vpop.f32.mrb[0].mxu0
        %v1221 = vadd.f32 %v944, %v1220
        %v1222 = vpop.f32.mrb[0].mxu0
        %v1223 = vpop.f32.mrb[0].mxu0
        %v1224 = vadd.f32 %v944, %v1223
        %v1225 = vpop.f32.mrb[0].mxu0
        %1226 = vmatprep.mubr.bf16.mxu0 %v872
        %1227 = vmatmul.mubr.bf16.gmra.mrb[0].mxu0 %v871
        %v1228 = vpop.f32.mrb[0].mxu0
        %v1229 = vadd.f32 %v944, %v1228
        %v1230 = vpop.f32.mrb[0].mxu0
        %v1231 = vpop.f32.mrb[0].mxu0
        %v1232 = vadd.f32 %v944, %v1231
        %v1233 = vpop.f32.mrb[0].mxu0
        %1234 = vdwg.mxu0
        %1235 = vmatprep.subr.bf16.mxu0 0
        %1236 = vmatpush1.bf16.msra.mxu0 %v1090
        %1237 = vmatprep.subr.bf16.mxu0 0
        %1238 = vmatpush1.bf16.msra.mxu0 %v1091
        %1239 = vmatprep.subr.bf16.mxu0 0
        %1240 = vmatpush1.bf16.msra.mxu0 %v1092
        %1241 = vmatprep.subr.bf16.mxu0 0
        %1242 = vmatpush1.bf16.msra.mxu0 %v1093
        %1243 = vmatprep.subr.bf16.mxu0 0
        %1244 = vmatpush1.bf16.msra.mxu0 %v1094
        %1245 = vmatprep.subr.bf16.mxu0 0
        %1246 = vmatpush1.bf16.msra.mxu0 %v1095
        %1247 = vmatprep.subr.bf16.mxu0 0
        %1248 = vmatpush1.bf16.msra.mxu0 %v1096
        %1249 = vmatprep.subr.bf16.mxu0 0
        %1250 = vmatpush1.bf16.msra.mxu0 %v1097
        %1251 = vmatprep.subr.bf16.mxu0 0
        %1252 = vmatpush1.bf16.msra.mxu0 %v1098
        %1253 = vmatprep.subr.bf16.mxu0 0
        %1254 = vmatpush1.bf16.msra.mxu0 %v1099
        %1255 = vmatprep.subr.bf16.mxu0 0
        %1256 = vmatpush1.bf16.msra.mxu0 %v1100
        %1257 = vmatprep.subr.bf16.mxu0 0
        %1258 = vmatpush1.bf16.msra.mxu0 %v1101
        %1259 = vmatprep.subr.bf16.mxu0 0
        %1260 = vmatpush1.bf16.msra.mxu0 %v1102
        %1261 = vmatprep.subr.bf16.mxu0 0
        %1262 = vmatpush1.bf16.msra.mxu0 %v1103
        %1263 = vmatprep.subr.bf16.mxu0 0
        %1264 = vmatpush1.bf16.msra.mxu0 %v1104
        %1265 = vmatprep.subr.bf16.mxu0 0
        %1266 = vmatpush1.bf16.msra.mxu0 %v1105
        %1267 = vmatprep.mubr.bf16.mxu0 %v846
        %1268 = vmatmul.mubr.bf16.gmra.mrb[0].mxu0 %v845
        %v1269 = vpop.f32.mrb[0].mxu0
        %v1270 = vadd.f32 %v1173, %v1269
        %v1271 = vpop.f32.mrb[0].mxu0
        %v1272 = vpop.f32.mrb[0].mxu0
        %v1273 = vadd.f32 %v1176, %v1272
        %v1274 = vpop.f32.mrb[0].mxu0
        %1275 = vmatprep.mubr.bf16.mxu0 %v850
        %1276 = vmatmul.mubr.bf16.gmra.mrb[0].mxu0 %v849
        %v1277 = vpop.f32.mrb[0].mxu0
        %v1278 = vadd.f32 %v1181, %v1277
        %v1279 = vpop.f32.mrb[0].mxu0
        %v1280 = vpop.f32.mrb[0].mxu0
        %v1281 = vadd.f32 %v1184, %v1280
        %v1282 = vpop.f32.mrb[0].mxu0
        %1283 = vmatprep.mubr.bf16.mxu0 %v854
        %1284 = vmatmul.mubr.bf16.gmra.mrb[0].mxu0 %v853
        %v1285 = vpop.f32.mrb[0].mxu0
        %v1286 = vadd.f32 %v1189, %v1285
        %v1287 = vpop.f32.mrb[0].mxu0
        %v1288 = vpop.f32.mrb[0].mxu0
        %v1289 = vadd.f32 %v1192, %v1288
        %v1290 = vpop.f32.mrb[0].mxu0
        %1291 = vmatprep.mubr.bf16.mxu0 %v858
        %1292 = vmatmul.mubr.bf16.gmra.mrb[0].mxu0 %v857
        %v1293 = vpop.f32.mrb[0].mxu0
        %v1294 = vadd.f32 %v1197, %v1293
        %v1295 = vpop.f32.mrb[0].mxu0
        %v1296 = vpop.f32.mrb[0].mxu0
        %v1297 = vadd.f32 %v1200, %v1296
        %v1298 = vpop.f32.mrb[0].mxu0
        %1299 = vmatprep.mubr.bf16.mxu0 %v862
        %1300 = vmatmul.mubr.bf16.gmra.mrb[0].mxu0 %v861
        %v1301 = vpop.f32.mrb[0].mxu0
        %v1302 = vadd.f32 %v1205, %v1301
        %v1303 = vpop.f32.mrb[0].mxu0
        %v1304 = vpop.f32.mrb[0].mxu0
        %v1305 = vadd.f32 %v1208, %v1304
        %v1306 = vpop.f32.mrb[0].mxu0
        %1307 = vmatprep.mubr.bf16.mxu0 %v866
        %1308 = vmatmul.mubr.bf16.gmra.mrb[0].mxu0 %v865
        %v1309 = vpop.f32.mrb[0].mxu0
        %v1310 = vadd.f32 %v1213, %v1309
        %v1311 = vpop.f32.mrb[0].mxu0
        %v1312 = vpop.f32.mrb[0].mxu0
        %v1313 = vadd.f32 %v1216, %v1312
        %v1314 = vpop.f32.mrb[0].mxu0
        %1315 = vmatprep.mubr.bf16.mxu0 %v870
        %1316 = vmatmul.mubr.bf16.gmra.mrb[0].mxu0 %v869
        %v1317 = vpop.f32.mrb[0].mxu0
        %v1318 = vadd.f32 %v1221, %v1317
        %v1319 = vpop.f32.mrb[0].mxu0
        %v1320 = vpop.f32.mrb[0].mxu0
        %v1321 = vadd.f32 %v1224, %v1320
        %v1322 = vpop.f32.mrb[0].mxu0
        %1323 = vmatprep.mubr.bf16.mxu0 %v874
        %1324 = vmatmul.mubr.bf16.gmra.mrb[0].mxu0 %v873
        %v1325 = vpop.f32.mrb[0].mxu0
        %v1326 = vadd.f32 %v1229, %v1325
        %v1327 = vpop.f32.mrb[0].mxu0
        %v1328 = vpop.f32.mrb[0].mxu0
        %v1329 = vadd.f32 %v1232, %v1328
        %v1330 = vpop.f32.mrb[0].mxu0
        %1331 = vdwg.mxu0
        %1332 = vst [vmem:[%s271] sm:$0xff] %v1270
        %1333 = vst [vmem:[%s271 + $0x8] sm:$0xff] %v1273
        %1334 = vst [vmem:[%s271 + $0x10] sm:$0xff] %v1278
        %1335 = vst [vmem:[%s271 + $0x18] sm:$0xff] %v1281
        %1336 = vst [vmem:[%s271 + $0x20] sm:$0xff] %v1286
        %1337 = vst [vmem:[%s271 + $0x28] sm:$0xff] %v1289
        %1338 = vst [vmem:[%s271 + $0x30] sm:$0xff] %v1294
        %1339 = vst [vmem:[%s271 + $0x38] sm:$0xff] %v1297
        %1340 = vst [vmem:[%s271 + $0x40] sm:$0xff] %v1302
        %1341 = vst [vmem:[%s271 + $0x48] sm:$0xff] %v1305
        %1342 = vst [vmem:[%s271 + $0x50] sm:$0xff] %v1310
        %1343 = vst [vmem:[%s271 + $0x58] sm:$0xff] %v1313
        %1344 = vst [vmem:[%s271 + $0x60] sm:$0xff] %v1318
        %1345 = vst [vmem:[%s271 + $0x68] sm:$0xff] %v1321
        %1346 = vst [vmem:[%s271 + $0x70] sm:$0xff] %v1326
        %1347 = vst [vmem:[%s271 + $0x78] sm:$0xff] %v1329
        %s1348 = sand.u32 %s141, 1
        %s1349 = scalar_lea.sflag [#allocation4], %s1348
        %s1350 = sand.u32 %s141, 1
        %s1351 = smul.addr %s1350, 128
        %s1352 = scalar_lea.vmem [#allocation8], %s1351
        // Predicated region
        $region53: #{tpu_custom_call.1} parent=39 // pred_check
          %p1353 = pneg %p151
        $region54: #{tpu_custom_call.1} parent=39 // pred_check_branch
          %1355 = sbr.rel (%p1353) target = $region56
        $region55: #{tpu_custom_call.1} parent=39 // pred_region
          %s1356 = smul.u32 16, %s23
          %s1358 = ssub.s32 2048, 2048
          %1359 = vsyncadd %s1349, %s1358
          %s1360 = smul.addr %s1356, 128
          %s1361 = scalar_lea.hbm %s5, %s1360
          %s1362 = sshll.u32 %s1352, 4
          %s1363 = int_to_ptr.vmem [resolvable:$true] %s1362
          %1368 = dma.vmem_to_hbm [thread:$0]  %s1363, 2048, %s1361, %s1349, 128, 128, 8
        $region56: #{tpu_custom_call.1} parent=39 // pred_fallthru
          _
      $region40: #{tpu_custom_call.1} parent=5 // pred_fallthru
        _
      %p1369 = scmp.le.s32.totalorder 2, %s18
      // Predicated region
      $region57: #{tpu_custom_call.1} parent=5 // pred_check
        %p1370 = pneg %p1369
      $region58: #{tpu_custom_call.1} parent=5 // pred_check_branch
        %1372 = sbr.rel (%p1370) target = $region60
      $region59: #{tpu_custom_call.1} parent=5 // pred_region
        %s1373 = ssub.s32 %s18, 2
        // Predicated region
        $region61: #{tpu_custom_call.1} parent=59 // pred_check
          %p1374 = pneg %p157
        $region62: #{tpu_custom_call.1} parent=59 // pred_check_branch
          %1376 = sbr.rel (%p1374) target = $region64
        $region63: #{tpu_custom_call.1} parent=59 // pred_region
          %s1377 = sand.u32 %s142, 1
          %s1378 = scalar_lea.sflag [#allocation4], %s1377
          %s1379 = sand.u32 %s142, 1
          %s1380 = smul.addr %s1379, 128
          %s1381 = scalar_lea.vmem [#allocation8], %s1380
          %1382 = dma.done %s1378, 2048
        $region64: #{tpu_custom_call.1} parent=59 // pred_fallthru
          _
      $region60: #{tpu_custom_call.1} parent=5 // pred_fallthru
        _
    $region6: #{tpu_custom_call.1} parent=1 // loop_footer
      %s22 = sadd.s32 1, %s18
    $region7: #{tpu_custom_call.1} parent=1 // loop_footer_branch
      %17 = sbr.rel target = $region3
    $region8: #{tpu_custom_call.1} parent=1 // loop_exit
      _
    %1383 = vsyncpa [#allocation3], 1
    %s1384 = scalar_lea.sflag [#allocation3], 1
    %1385 = vsyncpa %s1384, 1
    %1386 = vsyncpa [#allocation6], 1
    %1387 = vsyncpa [#allocation4], 1
    %s1388 = scalar_lea.sflag [#allocation4], 1
    %1389 = vsyncpa %s1388, 1

</llo_original>
